<compile_context>
chip_gen: v5e
topology: v5e:2x2
jax: 0.10.0
libtpu: 0.0.40
codegen_flags: <defaults>
</compile_context>

<pallas_src>
import functools

import jax
import jax.numpy as jnp
from jax.experimental import pallas as pl
from jax.experimental.pallas import tpu as pltpu


EPSILON = 1e-5


def scaled_norm_kernel(scale_ref, x_ref, o_ref, *, epsilon):
    # scale_ref: SMEM scalar [1, 1]
    # x_ref / o_ref: VMEM tile [tile_rows, hidden]
    x = x_ref[...].astype(jnp.float32)
    mean_square = jnp.mean(x * x, axis=-1, keepdims=True)
    # Fold the learned scalar into the per-row factor: one [tile_rows, 1]
    # multiply instead of an extra full-tile VPU multiply.
    factor = jax.lax.rsqrt(mean_square + epsilon) * scale_ref[0, 0]
    o_ref[...] = (x * factor).astype(o_ref.dtype)


def _pick_tile_rows(rows, hidden, dtype):
    """Largest row-tile that fits the VMEM budget, sublane-aligned for dtype."""
    itemsize = jnp.dtype(dtype).itemsize
    # Sub-32-bit dtypes pack along sublanes: bf16 vreg = [16,128], int8 = [32,128].
    sublane = {4: 8, 2: 16, 1: 32}.get(itemsize, 8)

    def round_up(v, m):
        return ((v + m - 1) // m) * m

    if rows <= sublane:
        # Single block equal to the full row extent (always a legal block dim).
        return rows

    # Budget for ONE input tile. Total VMEM use is roughly
    # 2 buffers x (input tile + output tile) + f32 temporaries ~ 4-6x this,
    # which stays well inside the 48 MiB scoped limit requested below and
    # leaves headroom under v7x's 64 MiB physical VMEM.
    budget_bytes = 4 * 1024 * 1024
    max_rows = budget_bytes // max(1, hidden * itemsize)
    max_rows = max(sublane, (max_rows // sublane) * sublane)
    max_rows = min(max_rows, 2048)

    # Keep a handful of grid steps so the "parallel" axis can shard rows
    # across TensorCores (v7x has 2 TCs per chip) and the pipeline can overlap.
    min_blocks = 4
    balanced = max(sublane, round_up(max(1, rows // min_blocks), sublane))

    # Never exceed the (sublane-floored) row count -> blocks never outsize the array.
    rows_floor = (rows // sublane) * sublane
    return max(sublane, min(max_rows, balanced, rows_floor))


def scaled_norm(x, scale, *, epsilon=EPSILON, tile_rows=None):
    """x: [..., hidden]; scale: scalar parameter (the module's nn.Parameter)."""
    orig_shape = x.shape
    hidden = orig_shape[-1]
    rows = 1
    for d in orig_shape[:-1]:
        rows *= d
    x2d = x.reshape(rows, hidden)

    if tile_rows is None:
        tile_rows = _pick_tile_rows(rows, hidden, x.dtype)

    # Note: for best store throughput hidden should be a multiple of 128
    # (lane-dense, unmasked vst); smaller hidden (like the 32 used in the demo)
    # still runs correctly but takes the masked-store path.
    grid = (pl.cdiv(rows, tile_rows),)

    scale_arr = jnp.asarray(scale, dtype=jnp.float32).reshape(1, 1)

    out = pl.pallas_call(
        functools.partial(scaled_norm_kernel, epsilon=epsilon),
        out_shape=jax.ShapeDtypeStruct((rows, hidden), x.dtype),
        grid=grid,
        in_specs=[
            pl.BlockSpec(memory_space=pltpu.SMEM),                # scale scalar
            pl.BlockSpec((tile_rows, hidden), lambda i: (i, 0)),  # x tile
        ],
        out_specs=pl.BlockSpec((tile_rows, hidden), lambda i: (i, 0)),
        compiler_params=pltpu.CompilerParams(
            dimension_semantics=("parallel",),
            vmem_limit_bytes=48 * 1024 * 1024,
        ),
    )(scale_arr, x2d)

    return out.reshape(orig_shape)


def scaled_norm_ref(x, scale, epsilon=EPSILON):
    x32 = x.astype(jnp.float32)
    ms = jnp.mean(x32 * x32, axis=-1, keepdims=True)
    return (x32 * jax.lax.rsqrt(ms + epsilon) * scale).astype(x.dtype)


if __name__ == "__main__":
    key = jax.random.PRNGKey(0)
    k1, k2, k3, k4 = jax.random.split(key, 4)

    # Parameter initialized exactly as in the PyTorch module: scale = 1.0
    scale = jnp.float32(1.0)

    # 1) Shape implied by the module usage: [batch, seq, hidden]
    x1 = jax.random.normal(k1, (2, 8, 32), dtype=jnp.float32)
    o1 = jax.block_until_ready(scaled_norm(x1, scale))
    r1 = scaled_norm_ref(x1, scale)
    assert o1.shape == x1.shape and o1.dtype == x1.dtype
    assert jnp.allclose(o1, r1, atol=1e-5, rtol=1e-5), "mismatch vs reference (f32)"

    # 2) Ragged row count (rows not a multiple of the tile) + lane-dense hidden,
    #    with a non-trivial scale.
    x2 = jax.random.normal(k2, (3, 7, 128), dtype=jnp.float32)
    o2 = jax.block_until_ready(scaled_norm(x2, jnp.float32(1.25)))
    r2 = scaled_norm_ref(x2, jnp.float32(1.25))
    assert jnp.allclose(o2, r2, atol=1e-5, rtol=1e-5), "mismatch vs reference (ragged)"

    # 3) bf16 input (packed sublanes -> tile_rows multiple of 16)
    x3 = jax.random.normal(k3, (2, 8, 256), dtype=jnp.bfloat16)
    o3 = jax.block_until_ready(scaled_norm(x3, scale))
    r3 = scaled_norm_ref(x3, scale)
    assert o3.dtype == x3.dtype
    assert jnp.allclose(o3.astype(jnp.float32), r3.astype(jnp.float32),
                        atol=2e-2, rtol=2e-2), "mismatch vs reference (bf16)"

    # 4) Multi-block path: enough rows that the grid has several steps
    #    (exercises the auto-pipelined / parallel row axis).
    x4 = jax.random.normal(k4, (4, 64, 128), dtype=jnp.float32)
    o4 = jax.block_until_ready(scaled_norm(x4, jnp.float32(0.75), tile_rows=64))
    r4 = scaled_norm_ref(x4, jnp.float32(0.75))
    assert jnp.allclose(o4, r4, atol=1e-5, rtol=1e-5), "mismatch vs reference (multi-block)"

    print("KERNEL_OK")
</pallas_src>

<mosaic_0001>
module attributes {stable_mosaic.version = 11 : i64} {
  func.func @scaled_norm_kernel(%arg0: i32, %arg1: memref<1x1xf32, #tpu.memory_space<smem>>, %arg2: memref<8x32xf32, #tpu.memory_space<vmem>>, %arg3: memref<8x32xf32, #tpu.memory_space<vmem>>) attributes {dimension_semantics = [#tpu.dimension_semantics<parallel>], iteration_bounds = array<i64: 2>, scalar_prefetch = 0 : i64, scratch_operands = 0 : i64, tpu.core_type = #tpu.core_type<tc>, window_params = [{transform_indices = @transform_0, window_bounds = array<i64: 1, 1>}, {transform_indices = @transform_1, window_bounds = array<i64: 8, 32>}, {transform_indices = @transform_2, window_bounds = array<i64: 8, 32>}]} {
    %c0 = arith.constant 0 : index
    %c0_0 = arith.constant 0 : index
    %0 = vector.load %arg2[%c0, %c0_0] : memref<8x32xf32, #tpu.memory_space<vmem>>, vector<8x32xf32>
    %1 = arith.mulf %0, %0 : vector<8x32xf32>
    %cst = arith.constant dense<0.000000e+00> : vector<8xf32>
    %2 = vector.multi_reduction <add>, %1, %cst [1] : vector<8x32xf32> to vector<8xf32>
    %3 = vector.shape_cast %2 : vector<8xf32> to vector<8x1xf32>
    %cst_1 = arith.constant 3.200000e+01 : f32
    %4 = vector.broadcast %cst_1 : f32 to vector<8x1xf32>
    %5 = arith.divf %3, %4 : vector<8x1xf32>
    %cst_2 = arith.constant 9.99999974E-6 : f32
    %6 = vector.broadcast %cst_2 : f32 to vector<8x1xf32>
    %7 = arith.addf %5, %6 : vector<8x1xf32>
    %8 = math.rsqrt %7 : vector<8x1xf32>
    %c0_3 = arith.constant 0 : index
    %c0_4 = arith.constant 0 : index
    %9 = memref.load %arg1[%c0_3, %c0_4] : memref<1x1xf32, #tpu.memory_space<smem>>
    %10 = vector.broadcast %9 : f32 to vector<8x1xf32>
    %11 = arith.mulf %8, %10 : vector<8x1xf32>
    %12 = vector.broadcast %11 : vector<8x1xf32> to vector<8x32xf32>
    %13 = arith.mulf %0, %12 : vector<8x32xf32>
    %c0_5 = arith.constant 0 : index
    %c0_6 = arith.constant 0 : index
    %14 = vector.load %arg3[%c0_5, %c0_6] : memref<8x32xf32, #tpu.memory_space<vmem>>, vector<8x32xf32>
    tpu.vector_store %arg3[%c0_5, %c0_6], %13 {strides = array<i32>} : memref<8x32xf32, #tpu.memory_space<vmem>>, vector<8x32xf32>,
    return
  }
  func.func @transform_0(%arg0: i32) -> (i32, i32) {
    %c0_i32 = arith.constant 0 : i32
    %c0_i32_0 = arith.constant 0 : i32
    %c0_i32_1 = arith.constant 0 : i32
    return %c0_i32, %c0_i32_0 : i32, i32
  }
  func.func @transform_1(%arg0: i32) -> (i32, i32) {
    %c0_i32 = arith.constant 0 : i32
    %c0_i32_0 = arith.constant 0 : i32
    return %arg0, %c0_i32 : i32, i32
  }
  func.func @transform_2(%arg0: i32) -> (i32, i32) {
    %c0_i32 = arith.constant 0 : i32
    %c0_i32_0 = arith.constant 0 : i32
    return %arg0, %c0_i32 : i32, i32
  }
}

</mosaic_0001>

<llo_original>
// kernel: tpu_custom_call.1
$region0: #{tpu_custom_call.1}
  #allocation0 [shape = 'u32[]', space=smem, size = 0x4, offset = 0x4, fixed_abs, tag = 'smem constant byte address 0x4 - core index']
  #allocation1 [shape = 'u32[72,128]{1,0:T(1,128)}', space=vmem, size = 0x9000, scoped, tag = 'internal scratch']
  #allocation2 [shape = 'f32[1,1]{1,0:T(1,128)S(6)}', space=smem, size = 0x200, scoped, tag = 'scoped memory for tpu_custom_call.1']
  %s0 = inlined_call_operand.<no memory space> [shape: f32[1,1], index: 0, kind: input, shape index: {}]
  %s1 = inlined_call_operand.hbm [shape: f32[16,32], index: 1, kind: input, shape index: {}]
  %s2 = inlined_call_operand.hbm [shape: f32[16,32], index: 2, kind: output, shape index: {}]
  %s3 = sld [smem:[#allocation0]]
  $region45: #{tpu_custom_call.1} parent=0
    _
  %s5 = ssub.s32 1, %s3
  %s6 = scalar_select 0, %s5, %s3
  %7 = sst [smem:[#allocation2]] %s0
  $region1: #{tpu_custom_call.1} parent=0
    #allocation3 [shape = 'u8[8192]{0}', space=vmem, size = 0x2000, scoped, tag = 'input window, operand 1']
    #allocation4 [shape = 's32[2]{0}', space=sflag, size = 0x8, scoped, tag = 'scoped memory for tpu_custom_call.1']
    #allocation5 [shape = 's32[2]{0}', space=sflag, size = 0x8, scoped, tag = 'scoped memory for tpu_custom_call.1']
    #allocation6 [shape = 'u8[8192]{0}', space=vmem, size = 0x2000, scoped, tag = 'output window, operand 0']
    %8 = vsyncpa [#allocation4], 0
    %s9 = scalar_lea.sflag [#allocation4], 1
    %10 = vsyncpa %s9, 0
    %11 = vsyncpa [#allocation5], 0
    %s12 = scalar_lea.sflag [#allocation5], 1
    %13 = vsyncpa %s12, 0
    loop: start=0, step=1, limit=4
    $region2: #{tpu_custom_call.1} parent=1 // loop_pre_header
      _
    $region3: #{tpu_custom_call.1} parent=1 // loop_header
      %s15 = sphi 0, %s19
      %p16 = scmp.ge.s32.totalorder %s15, 4
      %s23 = sphi 0, %s23
      %s25 = sphi 0, %s23
      %s26 = sphi 0, %s25
      %s40 = sphi 0, %s26
      %s46 = sphi 0, %s48
      %s49 = sphi 0, %s46
      %s50 = sphi 0, %s49
      %s66 = sphi 0, %s50
      %s72 = sphi 0, %s74
      %s75 = sphi 0, %s72
      %s76 = sphi 0, %s75
      %s92 = sphi 0, %s76
    $region4: #{tpu_custom_call.1} parent=1 // loop_header_branch
      %18 = sbr.rel (%p16) target = $region8
    $region5: #{tpu_custom_call.1} parent=1 // loop_body
      %s20 = ssub.s32 %s15, 1
      %s21 = ssub.s32 %s15, 2
      %s22 = sadd.s32 %s15, 1
      %s24 = sadd.s32 %s23, 1
      %p27 = scmp.eq.s32.totalorder %s15, 1
      %p28 = scmp.ne.s32.totalorder %s23, %s25
      %p29 = scmp.eq.s32.totalorder %s15, 0
      %p30 = por %p28, %p29
      %p31 = scmp.ne.s32.totalorder %s23, %s25
      %p32 = scmp.eq.s32.totalorder %s20, 1
      %p33 = por %p31, %p32
      %p34 = scmp.ne.s32.totalorder %s25, %s26
      %p35 = scmp.eq.s32.totalorder %s20, 0
      %p36 = por %p34, %p35
      %p37 = scmp.ne.s32.totalorder %s25, %s26
      %p38 = scmp.eq.s32.totalorder %s21, 1
      %p39 = por %p37, %p38
      %p41 = scmp.ne.s32.totalorder %s26, %s40
      %p42 = scmp.eq.s32.totalorder %s21, 0
      %p43 = por %p41, %p42
      %s44 = ssub.s32 %s15, %s22
      %p45 = scmp.eq.s32.totalorder %s44, 0
      %s47 = sadd.s32 %s46, 1
      %s48 = scalar_select %p45, %s46, %s47
      %p51 = pneg %p45
      %p52 = scmp.eq.s32.totalorder %s15, 1
      %p53 = por %p51, %p52
      %p54 = scmp.ne.s32.totalorder %s46, %s49
      %p55 = scmp.eq.s32.totalorder %s15, 0
      %p56 = por %p54, %p55
      %p57 = scmp.ne.s32.totalorder %s46, %s49
      %p58 = scmp.eq.s32.totalorder %s20, 1
      %p59 = por %p57, %p58
      %p60 = scmp.ne.s32.totalorder %s49, %s50
      %p61 = scmp.eq.s32.totalorder %s20, 0
      %p62 = por %p60, %p61
      %p63 = scmp.ne.s32.totalorder %s49, %s50
      %p64 = scmp.eq.s32.totalorder %s21, 1
      %p65 = por %p63, %p64
      %p67 = scmp.ne.s32.totalorder %s50, %s66
      %p68 = scmp.eq.s32.totalorder %s21, 0
      %p69 = por %p67, %p68
      %s70 = ssub.s32 %s15, %s22
      %p71 = scmp.eq.s32.totalorder %s70, 0
      %s73 = sadd.s32 %s72, 1
      %s74 = scalar_select %p71, %s72, %s73
      %p77 = pneg %p71
      %p78 = scmp.eq.s32.totalorder %s15, 1
      %p79 = por %p77, %p78
      %p80 = scmp.ne.s32.totalorder %s72, %s75
      %p81 = scmp.eq.s32.totalorder %s15, 0
      %p82 = por %p80, %p81
      %p83 = scmp.ne.s32.totalorder %s72, %s75
      %p84 = scmp.eq.s32.totalorder %s20, 1
      %p85 = por %p83, %p84
      %p86 = scmp.ne.s32.totalorder %s75, %s76
      %p87 = scmp.eq.s32.totalorder %s20, 0
      %p88 = por %p86, %p87
      %p89 = scmp.ne.s32.totalorder %s75, %s76
      %p90 = scmp.eq.s32.totalorder %s21, 1
      %p91 = por %p89, %p90
      %p93 = scmp.ne.s32.totalorder %s76, %s92
      %p94 = scmp.eq.s32.totalorder %s21, 0
      %p95 = por %p93, %p94
      %p96 = scmp.le.s32.totalorder 1, %s15
      %p97 = scmp.lt.s32.totalorder %s15, 3
      %p98 = pnand %p96, %p97
      %p99 = pneg %p98
      // Predicated region
      $region9: #{tpu_custom_call.1} parent=5 // pred_check
        _
      $region10: #{tpu_custom_call.1} parent=5 // pred_check_branch
        %101 = sbr.rel (%p98) target = $region12
      $region11: #{tpu_custom_call.1} parent=5 // pred_region
        %s102 = ssub.s32 %s15, 1
        // Predicated region
        $region13: #{tpu_custom_call.1} parent=11 // pred_check
          %p103 = pneg %p36
        $region14: #{tpu_custom_call.1} parent=11 // pred_check_branch
          %105 = sbr.rel (%p103) target = $region16
        $region15: #{tpu_custom_call.1} parent=11 // pred_region
          _
        $region16: #{tpu_custom_call.1} parent=11 // pred_fallthru
          _
      $region12: #{tpu_custom_call.1} parent=5 // pred_fallthru
        _
      %p106 = scmp.lt.s32.totalorder %s15, 2
      // Predicated region
      $region17: #{tpu_custom_call.1} parent=5 // pred_check
        %p107 = pneg %p106
      $region18: #{tpu_custom_call.1} parent=5 // pred_check_branch
        %109 = sbr.rel (%p107) target = $region20
      $region19: #{tpu_custom_call.1} parent=5 // pred_region
        // Predicated region
        $region21: #{tpu_custom_call.1} parent=19 // pred_check
          %p110 = pneg %p56
        $region22: #{tpu_custom_call.1} parent=19 // pred_check_branch
          %112 = sbr.rel (%p110) target = $region24
        $region23: #{tpu_custom_call.1} parent=19 // pred_region
          %s113 = sand.u32 %s46, 1
          %s114 = scalar_lea.sflag [#allocation4], %s113
          %s115 = sand.u32 %s46, 1
          %s116 = smul.addr %s115, 8
          %s117 = scalar_lea.vmem [#allocation3], %s116
          %119 = vsyncadd %s114, 0
          %s120 = smul.addr %s15, 8
          %s121 = scalar_lea.hbm %s1, %s120
          %s123 = sshll.u32 %s121, 4
          %s124 = int_to_ptr.hbm [resolvable:$true] %s123
          %s125 = sshll.u32 %s117, 4
          %s126 = int_to_ptr.vmem [resolvable:$true] %s125
          %128 = dma.hbm_to_vmem [thread:$0]  %s124, 128, %s126, %s114
        $region24: #{tpu_custom_call.1} parent=19 // pred_fallthru
          _
      $region20: #{tpu_custom_call.1} parent=5 // pred_fallthru
        _
      %p129 = scmp.le.s32.totalorder 1, %s15
      %p130 = scmp.lt.s32.totalorder %s15, 3
      %p131 = pnand %p129, %p130
      %p132 = pneg %p131
      // Predicated region
      $region25: #{tpu_custom_call.1} parent=5 // pred_check
        _
      $region26: #{tpu_custom_call.1} parent=5 // pred_check_branch
        %134 = sbr.rel (%p131) target = $region28
      $region27: #{tpu_custom_call.1} parent=5 // pred_region
        %s135 = ssub.s32 %s15, 1
        %s136 = sand.u32 %s49, 1
        %s137 = scalar_lea.sflag [#allocation4], %s136
        %s138 = sand.u32 %s49, 1
        %s139 = smul.addr %s138, 8
        %s140 = scalar_lea.vmem [#allocation3], %s139
        // Predicated region
        $region29: #{tpu_custom_call.1} parent=27 // pred_check
          %p141 = pneg %p62
        $region30: #{tpu_custom_call.1} parent=27 // pred_check_branch
          %143 = sbr.rel (%p141) target = $region32
        $region31: #{tpu_custom_call.1} parent=27 // pred_region
          %145 = dma.done %s137, 128
        $region32: #{tpu_custom_call.1} parent=27 // pred_fallthru
          _
        %p146 = pneg %p36
        %p147 = pneg %p33
        %s148 = sand.u32 %s49, 1
        %s149 = scalar_lea.sflag [#allocation4], %s148
        %s150 = sand.u32 %s49, 1
        %s151 = smul.addr %s150, 8
        %s152 = scalar_lea.vmem [#allocation3], %s151
        %p153 = pneg %p62
        %p154 = pneg %p59
        %p155 = pneg %p88
        %p156 = pneg %p85
        %s157 = sand.u32 %s75, 1
        %s158 = scalar_lea.sflag [#allocation5], %s157
        %s159 = sand.u32 %s75, 1
        %s160 = smul.addr %s159, 8
        %s161 = scalar_lea.vmem [#allocation6], %s160
        %v162 = vld [vmem:[%s140] sm:$0xff]
        %v163 = vmul.f32 %v162, %v162
        %vm164 = vcmask 261120
        %v165 = vsel %vm164, %v163, 0.0
        %166 = vadd.xlane.f32.xlu0 %v165
        %v167 = vpop.xlane.xlu0 %166
        %v168 = vrcp.pop 32.0
        %v169 = vmul.f32 32.0, %v168
        %v170 = vsub.f32 1.0, %v169
        %v171 = vmul.f32 %v168, %v170
        %v172 = vadd.f32 %v168, %v171
        %vm173 = vweird.f32 %v168
        %v174 = vsel %vm173, %v168, %v172
        %v175 = vmul.f32 %v167, %v174
        %v176 = vadd.f32 %v175, 1e-05
        %v177 = vrsqrt.pop %v176
        %v178 = vmul.f32 %v177, %v176
        %v179 = vmul.f32 %v178, %v177
        %v180 = vmul.f32 0.5, %v179
        %v181 = vsub.f32 1.5, %v180
        %v182 = vmul.f32 %v177, %v181
        %vm183 = vweird.f32 %v176
        %vm184 = vweird.f32 %v177
        %vm185 = vmor %vm183, %vm184
        %v186 = vsel %vm185, %v177, %v182
        %s187 = sld [smem:[#allocation2]]
        %v188 = vstv %s187
        %v189 = vmul.f32 %v186, %v188
        %v190 = vmul.f32 %v162, %v189
        %191 = vst.msk [vmem:[%s161] sm:$0xff] %vm164, %v190
        %s192 = sand.u32 %s75, 1
        %s193 = scalar_lea.sflag [#allocation5], %s192
        %s194 = sand.u32 %s75, 1
        %s195 = smul.addr %s194, 8
        %s196 = scalar_lea.vmem [#allocation6], %s195
        // Predicated region
        $region33: #{tpu_custom_call.1} parent=27 // pred_check
          %p197 = pneg %p85
        $region34: #{tpu_custom_call.1} parent=27 // pred_check_branch
          %199 = sbr.rel (%p197) target = $region36
        $region35: #{tpu_custom_call.1} parent=27 // pred_region
          %201 = vsyncadd %s193, 0
          %s202 = smul.addr %s20, 8
          %s203 = scalar_lea.hbm %s2, %s202
          %s205 = sshll.u32 %s196, 4
          %s206 = int_to_ptr.vmem [resolvable:$true] %s205
          %s207 = sshll.u32 %s203, 4
          %s208 = int_to_ptr.hbm [resolvable:$true] %s207
          %210 = dma.vmem_to_hbm [thread:$0]  %s206, 128, %s208, %s193
        $region36: #{tpu_custom_call.1} parent=27 // pred_fallthru
          _
      $region28: #{tpu_custom_call.1} parent=5 // pred_fallthru
        _
      %p211 = scmp.le.s32.totalorder 2, %s15
      // Predicated region
      $region37: #{tpu_custom_call.1} parent=5 // pred_check
        %p212 = pneg %p211
      $region38: #{tpu_custom_call.1} parent=5 // pred_check_branch
        %214 = sbr.rel (%p212) target = $region40
      $region39: #{tpu_custom_call.1} parent=5 // pred_region
        %s215 = ssub.s32 %s15, 2
        // Predicated region
        $region41: #{tpu_custom_call.1} parent=39 // pred_check
          %p216 = pneg %p91
        $region42: #{tpu_custom_call.1} parent=39 // pred_check_branch
          %218 = sbr.rel (%p216) target = $region44
        $region43: #{tpu_custom_call.1} parent=39 // pred_region
          %s219 = sand.u32 %s76, 1
          %s220 = scalar_lea.sflag [#allocation5], %s219
          %s221 = sand.u32 %s76, 1
          %s222 = smul.addr %s221, 8
          %s223 = scalar_lea.vmem [#allocation6], %s222
          %225 = dma.done %s220, 128
        $region44: #{tpu_custom_call.1} parent=39 // pred_fallthru
          _
      $region40: #{tpu_custom_call.1} parent=5 // pred_fallthru
        _
    $region6: #{tpu_custom_call.1} parent=1 // loop_footer
      %s19 = sadd.s32 1, %s15
    $region7: #{tpu_custom_call.1} parent=1 // loop_footer_branch
      %14 = sbr.rel target = $region3
    $region8: #{tpu_custom_call.1} parent=1 // loop_exit
      _
    %226 = vsyncpa [#allocation4], 1
    %s227 = scalar_lea.sflag [#allocation4], 1
    %228 = vsyncpa %s227, 1
    %229 = vsyncpa [#allocation5], 1
    %s230 = scalar_lea.sflag [#allocation5], 1
    %231 = vsyncpa %s230, 1

</llo_original>
